<compile_context>
chip_gen: v6e
topology: v6e:2x2x1
jax: 0.10.0
libtpu: 0.0.40
codegen_flags: <defaults>
</compile_context>

<pallas_src>
import math
import functools

import jax
import jax.numpy as jnp
from jax.experimental import pallas as pl
from jax.experimental.pallas import tpu as pltpu


# ---------------------------------------------------------------------------
# Nonlinearities
# ---------------------------------------------------------------------------
def _mish_fast(z):
    """mish(z) = z * tanh(softplus(z)) rewritten as z * w/(w+2), w = u*(u+2), u = exp(z).

    One EUP exp + one approx reciprocal per element (vs exp/log1p/tanh).  z is clamped before the
    exp to avoid f32 overflow; for z > 20 the ratio is 1.0 to f32 precision, i.e. the identity
    branch of mish, so the clamp is exact.
    """
    u = jnp.exp(jnp.minimum(z, 20.0))
    w = u * (u + 2.0)
    return z * (w * pl.reciprocal(w + 2.0, approx=True))


def _mish_ref(z):
    # Exact mish for the pure-JAX reference (stable softplus via logaddexp).
    return z * jnp.tanh(jnp.logaddexp(z, 0.0))


# ---------------------------------------------------------------------------
# Kernel
# ---------------------------------------------------------------------------
def ma_mlp_kernel(time_ref, freqs_ref, xobs_ref,
                  tw1s_ref, tw1c_ref, tb1_ref, tw2_ref, tb2_ref,
                  w1xs_ref, w1t_ref, b1_ref,
                  w2_ref, b2_ref, w3_ref, b3_ref,
                  wf_ref, bf_ref,
                  out_ref):
    """One batch row-block; all agents fused via block-diagonal / concatenated bf16 weights."""

    def mm(lhs_bf16, w_ref):
        # bf16 MXU inputs, f32 accumulation.
        return jnp.dot(lhs_bf16, w_ref[...], preferred_element_type=jnp.float32)

    def mm32(lhs_f32, w_ref):
        return mm(lhs_f32.astype(jnp.bfloat16), w_ref)

    # ---- fused sinusoidal time embedding (EUP sin/cos, no separate XLA op) ----
    arg = time_ref[...] * freqs_ref[...]                  # (tm, 1) * (1, half) -> (tm, half)
    sin_e = jnp.sin(arg)
    cos_e = jnp.cos(arg)

    # ---- time MLP: Linear -> Mish -> Linear (tw1 row-split over [sin, cos]) ----
    t = _mish_fast(mm32(sin_e, tw1s_ref) + mm32(cos_e, tw1c_ref) + tb1_ref[...])   # (tm, A*2*t_dim)
    t = mm32(t, tw2_ref) + tb2_ref[...]                                            # (tm, A*t_dim)

    # ---- mid layer 1: concat([x, t, obs]) @ W1 as two matmuls (x/obs rows pre-stacked) ----
    h = _mish_fast(mm(xobs_ref[...], w1xs_ref) + mm32(t, w1t_ref) + b1_ref[...])   # (tm, A*H)

    # ---- mid layers 2, 3 ----
    h = _mish_fast(mm32(h, w2_ref) + b2_ref[...])
    h = _mish_fast(mm32(h, w3_ref) + b3_ref[...])

    # ---- final layer: one lane-dense output slab (tm, A*action_dim) ----
    out_ref[...] = (mm32(h, wf_ref) + bf_ref[...]).astype(out_ref.dtype)


# ---------------------------------------------------------------------------
# One-time parameter packing (outside jit)
# ---------------------------------------------------------------------------
def pack_params(params, *, t_dim):
    """Fuse per-agent stacked params into concatenated / block-diagonal matrices.

    Shared-input layer (time layer 1) -> column-concatenated weights, row-split for [sin|cos].
    Per-agent layers -> block-diagonal weights; x/obs mid-layer-1 blocks row-stacked into one W1xs.
    Weight matrices are bf16 (MXU inputs); biases and the frequency row stay f32.
    """
    A = params["w2"].shape[0]
    H = params["w2"].shape[1]
    half = t_dim // 2

    # Block-diagonal fusion scales O((A*width)^2) in zero-FLOPs and VMEM; beyond this switch to a
    # per-agent "parallel" grid axis with per-agent weight tiles.
    assert A * max(H, 2 * t_dim) <= 512, "agent fusion too wide; use a per-agent grid axis instead"

    def col_concat(w):                      # (A, din, dout) -> (din, A*dout)
        return jnp.concatenate([w[a] for a in range(A)], axis=1)

    def block_diag(w):                      # (A, din, dout) -> (A*din, A*dout)
        a_dim, din, dout = w.shape
        out = jnp.zeros((a_dim * din, a_dim * dout), w.dtype)
        for a in range(a_dim):
            out = out.at[a * din:(a + 1) * din, a * dout:(a + 1) * dout].set(w[a])
        return out

    def bias_row(b):                        # (A, 1, dout) -> (1, A*dout)
        return b.reshape(1, -1).astype(jnp.float32)

    bf16 = lambda w: w.astype(jnp.bfloat16)

    tw1 = col_concat(params["tw1"])                         # (t_dim, A*2*t_dim)
    w1xs = jnp.concatenate([block_diag(params["w1x"]),      # rows: [A*action_dim ; A*obs_dim]
                            block_diag(params["w1s"])], axis=0)

    scale = math.log(10000.0) / max(half - 1, 1)
    freqs = jnp.exp(jnp.arange(half, dtype=jnp.float32) * -scale).reshape(1, half)

    return {
        "freqs": freqs,
        "tw1s": bf16(tw1[:half]), "tw1c": bf16(tw1[half:]), "tb1": bias_row(params["tb1"]),
        "tw2": bf16(block_diag(params["tw2"])),             "tb2": bias_row(params["tb2"]),
        "w1xs": bf16(w1xs),
        "w1t": bf16(block_diag(params["w1t"])),             "b1": bias_row(params["b1"]),
        "w2": bf16(block_diag(params["w2"])),               "b2": bias_row(params["b2"]),
        "w3": bf16(block_diag(params["w3"])),               "b3": bias_row(params["b3"]),
        "wf": bf16(block_diag(params["wf"])),               "bf": bias_row(params["bf"]),
    }


# ---------------------------------------------------------------------------
# Forward wrapper
# ---------------------------------------------------------------------------
def ma_mlp_forward(x, time, obs, packed, *, t_dim):
    """x: (B, A, action_dim), time: (B,), obs: (B, A, obs_dim) -> (B, A, action_dim)."""
    B, A, action_dim = x.shape
    obs_dim = obs.shape[-1]
    half = t_dim // 2
    H = packed["w2"].shape[0] // A

    # Trailing-dim merges are free bitcasts; x/obs go straight to bf16 (MXU inputs only).
    xobs = jnp.concatenate([x.reshape(B, A * action_dim),
                            obs.reshape(B, A * obs_dim)], axis=-1).astype(jnp.bfloat16)
    time2 = time.astype(jnp.float32).reshape(B, 1)

    # Batch row-blocks: single block at small B; 128-row tiles (>=2 of them) when B is large so
    # the "parallel" axis can split across v7x's two TensorCores.
    tm = 128 if (B >= 256 and B % 128 == 0) else B
    nb = B // tm

    p = packed
    weight_keys = ("tw1s", "tw1c", "tb1", "tw2", "tb2",
                   "w1xs", "w1t", "b1", "w2", "b2", "w3", "b3", "wf", "bf")
    weights = [p[k] for k in weight_keys]

    def row_spec(width):                    # tiled along batch rows
        return pl.BlockSpec((tm, width), lambda i: (i, 0))

    def const_spec(arr):                    # full array, constant block -> VMEM-resident
        return pl.BlockSpec(arr.shape, lambda i: (0, 0))

    in_specs = ([row_spec(1), const_spec(p["freqs"]),
                 row_spec(A * (action_dim + obs_dim))]
                + [const_spec(w) for w in weights])
    out_spec = row_spec(A * action_dim)

    flops = int(2 * B * (t_dim * A * 2 * t_dim
                         + (A * 2 * t_dim) * (A * t_dim)
                         + (A * (action_dim + obs_dim)) * (A * H)
                         + (A * t_dim) * (A * H)
                         + 2 * (A * H) * (A * H)
                         + (A * H) * (A * action_dim)))
    transcendentals = int(B * (t_dim + 2 * (A * 2 * t_dim + 3 * A * H)))
    inputs = (time2, p["freqs"], xobs, *weights)
    bytes_accessed = int(sum(int(a.size) * jnp.dtype(a.dtype).itemsize for a in inputs)
                         + B * A * action_dim * 4)

    out2 = pl.pallas_call(
        ma_mlp_kernel,
        out_shape=jax.ShapeDtypeStruct((B, A * action_dim), jnp.float32),
        grid=(nb,),
        in_specs=in_specs,
        out_specs=out_spec,
        compiler_params=pltpu.CompilerParams(dimension_semantics=("parallel",)),
        cost_estimate=pl.CostEstimate(flops=flops,
                                      transcendentals=transcendentals,
                                      bytes_accessed=bytes_accessed),
    )(*inputs)

    return out2.reshape(B, A, action_dim)


# ---------------------------------------------------------------------------
# Synthetic init + pure-JAX reference (PyTorch semantics)
# ---------------------------------------------------------------------------
def init_params(key, n_agents, obs_dim, action_dim, t_dim, hidden):
    ks = jax.random.split(key, 14)

    def w(k, shape, fan_in):
        return (jax.random.normal(k, shape, jnp.float32) / math.sqrt(fan_in)).astype(jnp.float32)

    A = n_agents
    in_dim = action_dim + t_dim + obs_dim
    return {
        "tw1": w(ks[0], (A, t_dim, 2 * t_dim), t_dim),
        "tb1": w(ks[1], (A, 1, 2 * t_dim), t_dim),
        "tw2": w(ks[2], (A, 2 * t_dim, t_dim), 2 * t_dim),
        "tb2": w(ks[3], (A, 1, t_dim), 2 * t_dim),
        # mid-layer-1 weight split by the concat order [x, t, obs]
        "w1x": w(ks[4], (A, action_dim, hidden), in_dim),
        "w1t": w(ks[5], (A, t_dim, hidden), in_dim),
        "w1s": w(ks[6], (A, obs_dim, hidden), in_dim),
        "b1":  w(ks[7], (A, 1, hidden), hidden),
        "w2":  w(ks[8], (A, hidden, hidden), hidden),
        "b2":  w(ks[9], (A, 1, hidden), hidden),
        "w3":  w(ks[10], (A, hidden, hidden), hidden),
        "b3":  w(ks[11], (A, 1, hidden), hidden),
        "wf":  w(ks[12], (A, hidden, action_dim), hidden),
        "bf":  w(ks[13], (A, 1, action_dim), hidden),
    }


def sinusoidal_pos_emb(time, dim):
    half = dim // 2
    scale = math.log(10000.0) / max(half - 1, 1)
    freqs = jnp.exp(jnp.arange(half, dtype=jnp.float32) * -scale)
    arg = time.astype(jnp.float32)[:, None] * freqs[None, :]
    return jnp.concatenate([jnp.sin(arg), jnp.cos(arg)], axis=-1)


def ma_mlp_reference(x, time, obs, params, *, t_dim):
    """Pure-JAX f32 per-agent reference with the PyTorch module's semantics."""
    temb = sinusoidal_pos_emb(time, t_dim)
    outs = []
    A = x.shape[1]
    for i in range(A):
        t = _mish_ref(temb @ params["tw1"][i] + params["tb1"][i])
        t = t @ params["tw2"][i] + params["tb2"][i]
        h = (x[:, i] @ params["w1x"][i] + t @ params["w1t"][i]
             + obs[:, i] @ params["w1s"][i] + params["b1"][i])
        h = _mish_ref(h)
        h = _mish_ref(h @ params["w2"][i] + params["b2"][i])
        h = _mish_ref(h @ params["w3"][i] + params["b3"][i])
        outs.append(h @ params["wf"][i] + params["bf"][i])
    return jnp.stack(outs, axis=1)


if __name__ == "__main__":
    B, n_agents = 8, 2
    obs_dim, action_dim = 11, 6
    t_dim, hidden = 16, 32

    key = jax.random.PRNGKey(0)
    k_x, k_obs, k_t, k_p = jax.random.split(key, 4)

    x = jax.random.normal(k_x, (B, n_agents, action_dim), jnp.float32)
    obs = jax.random.normal(k_obs, (B, n_agents, obs_dim), jnp.float32)
    time = jax.random.randint(k_t, (B,), 0, 100).astype(jnp.float32)

    params = init_params(k_p, n_agents, obs_dim, action_dim, t_dim, hidden)
    packed = pack_params(params, t_dim=t_dim)     # one-time agent fusion + bf16 weight cast

    fwd = jax.jit(functools.partial(ma_mlp_forward, t_dim=t_dim))
    out = fwd(x, time, obs, packed)
    jax.block_until_ready(out)

    ref = ma_mlp_reference(x, time, obs, params, t_dim=t_dim)
    assert out.shape == (B, n_agents, action_dim)
    max_err = float(jnp.max(jnp.abs(out - ref)))
    assert jnp.allclose(out, ref, atol=3e-2, rtol=3e-2), \
        f"mismatch vs JAX reference (max abs err {max_err})"

    print("KERNEL_OK")
</pallas_src>

<mosaic_0001>
module attributes {stable_mosaic.version = 11 : i64} {
  func.func @ma_mlp_kernel(%arg0: i32, %arg1: memref<8x1xf32, #tpu.memory_space<vmem>>, %arg2: memref<1x8xf32, #tpu.memory_space<vmem>>, %arg3: memref<8x34xbf16, #tpu.memory_space<vmem>>, %arg4: memref<8x64xbf16, #tpu.memory_space<vmem>>, %arg5: memref<8x64xbf16, #tpu.memory_space<vmem>>, %arg6: memref<1x64xf32, #tpu.memory_space<vmem>>, %arg7: memref<64x32xbf16, #tpu.memory_space<vmem>>, %arg8: memref<1x32xf32, #tpu.memory_space<vmem>>, %arg9: memref<34x64xbf16, #tpu.memory_space<vmem>>, %arg10: memref<32x64xbf16, #tpu.memory_space<vmem>>, %arg11: memref<1x64xf32, #tpu.memory_space<vmem>>, %arg12: memref<64x64xbf16, #tpu.memory_space<vmem>>, %arg13: memref<1x64xf32, #tpu.memory_space<vmem>>, %arg14: memref<64x64xbf16, #tpu.memory_space<vmem>>, %arg15: memref<1x64xf32, #tpu.memory_space<vmem>>, %arg16: memref<64x12xbf16, #tpu.memory_space<vmem>>, %arg17: memref<1x12xf32, #tpu.memory_space<vmem>>, %arg18: memref<8x12xf32, #tpu.memory_space<vmem>>) attributes {dimension_semantics = [#tpu.dimension_semantics<parallel>], iteration_bounds = array<i64: 1>, scalar_prefetch = 0 : i64, scratch_operands = 0 : i64, tpu.core_type = #tpu.core_type<tc>, window_params = [{transform_indices = @transform_0, window_bounds = array<i64: 8, 1>}, {pipeline_mode = #tpu.pipeline_mode<synchronous>, transform_indices = @transform_1, window_bounds = array<i64: 1, 8>}, {transform_indices = @transform_2, window_bounds = array<i64: 8, 34>}, {pipeline_mode = #tpu.pipeline_mode<synchronous>, transform_indices = @transform_3, window_bounds = array<i64: 8, 64>}, {pipeline_mode = #tpu.pipeline_mode<synchronous>, transform_indices = @transform_4, window_bounds = array<i64: 8, 64>}, {pipeline_mode = #tpu.pipeline_mode<synchronous>, transform_indices = @transform_5, window_bounds = array<i64: 1, 64>}, {pipeline_mode = #tpu.pipeline_mode<synchronous>, transform_indices = @transform_6, window_bounds = array<i64: 64, 32>}, {pipeline_mode = #tpu.pipeline_mode<synchronous>, transform_indices = @transform_7, window_bounds = array<i64: 1, 32>}, {pipeline_mode = #tpu.pipeline_mode<synchronous>, transform_indices = @transform_8, window_bounds = array<i64: 34, 64>}, {pipeline_mode = #tpu.pipeline_mode<synchronous>, transform_indices = @transform_9, window_bounds = array<i64: 32, 64>}, {pipeline_mode = #tpu.pipeline_mode<synchronous>, transform_indices = @transform_10, window_bounds = array<i64: 1, 64>}, {pipeline_mode = #tpu.pipeline_mode<synchronous>, transform_indices = @transform_11, window_bounds = array<i64: 64, 64>}, {pipeline_mode = #tpu.pipeline_mode<synchronous>, transform_indices = @transform_12, window_bounds = array<i64: 1, 64>}, {pipeline_mode = #tpu.pipeline_mode<synchronous>, transform_indices = @transform_13, window_bounds = array<i64: 64, 64>}, {pipeline_mode = #tpu.pipeline_mode<synchronous>, transform_indices = @transform_14, window_bounds = array<i64: 1, 64>}, {pipeline_mode = #tpu.pipeline_mode<synchronous>, transform_indices = @transform_15, window_bounds = array<i64: 64, 12>}, {pipeline_mode = #tpu.pipeline_mode<synchronous>, transform_indices = @transform_16, window_bounds = array<i64: 1, 12>}, {transform_indices = @transform_17, window_bounds = array<i64: 8, 12>}]} {
    %c0 = arith.constant 0 : index
    %c0_0 = arith.constant 0 : index
    %0 = vector.load %arg1[%c0, %c0_0] : memref<8x1xf32, #tpu.memory_space<vmem>>, vector<8x1xf32>
    %c0_1 = arith.constant 0 : index
    %c0_2 = arith.constant 0 : index
    %1 = vector.load %arg2[%c0_1, %c0_2] : memref<1x8xf32, #tpu.memory_space<vmem>>, vector<1x8xf32>
    %2 = vector.broadcast %0 : vector<8x1xf32> to vector<8x8xf32>
    %3 = vector.broadcast %1 : vector<1x8xf32> to vector<8x8xf32>
    %4 = arith.mulf %2, %3 : vector<8x8xf32>
    %5 = math.sin %4 : vector<8x8xf32>
    %6 = math.cos %4 : vector<8x8xf32>
    %7 = arith.truncf %5 : vector<8x8xf32> to vector<8x8xbf16>
    %c0_3 = arith.constant 0 : index
    %c0_4 = arith.constant 0 : index
    %8 = vector.load %arg4[%c0_3, %c0_4] : memref<8x64xbf16, #tpu.memory_space<vmem>>, vector<8x64xbf16>
    %cst = arith.constant dense<0.000000e+00> : vector<8x64xf32>
    %9 = tpu.matmul %7, %8, %cst {dimension_numbers = #tpu.dot_dimension_numbers<[1], [0], [0], [1], [0, 0, 1, 1], [], []>} : vector<8x8xbf16>, vector<8x64xbf16>, vector<8x64xf32> -> vector<8x64xf32>
    %10 = arith.truncf %6 : vector<8x8xf32> to vector<8x8xbf16>
    %c0_5 = arith.constant 0 : index
    %c0_6 = arith.constant 0 : index
    %11 = vector.load %arg5[%c0_5, %c0_6] : memref<8x64xbf16, #tpu.memory_space<vmem>>, vector<8x64xbf16>
    %cst_7 = arith.constant dense<0.000000e+00> : vector<8x64xf32>
    %12 = tpu.matmul %10, %11, %cst_7 {dimension_numbers = #tpu.dot_dimension_numbers<[1], [0], [0], [1], [0, 0, 1, 1], [], []>} : vector<8x8xbf16>, vector<8x64xbf16>, vector<8x64xf32> -> vector<8x64xf32>
    %13 = arith.addf %9, %12 : vector<8x64xf32>
    %c0_8 = arith.constant 0 : index
    %c0_9 = arith.constant 0 : index
    %14 = vector.load %arg6[%c0_8, %c0_9] : memref<1x64xf32, #tpu.memory_space<vmem>>, vector<1x64xf32>
    %15 = vector.broadcast %14 : vector<1x64xf32> to vector<8x64xf32>
    %16 = arith.addf %13, %15 : vector<8x64xf32>
    %cst_10 = arith.constant 2.000000e+01 : f32
    %17 = vector.broadcast %cst_10 : f32 to vector<8x64xf32>
    %18 = arith.minimumf %16, %17 : vector<8x64xf32>
    %19 = math.exp %18 : vector<8x64xf32>
    %cst_11 = arith.constant 2.000000e+00 : f32
    %20 = vector.broadcast %cst_11 : f32 to vector<8x64xf32>
    %21 = arith.addf %19, %20 : vector<8x64xf32>
    %22 = arith.mulf %19, %21 : vector<8x64xf32>
    %cst_12 = arith.constant 2.000000e+00 : f32
    %23 = vector.broadcast %cst_12 : f32 to vector<8x64xf32>
    %24 = arith.addf %22, %23 : vector<8x64xf32>
    %25 = tpu.reciprocal %24 {approx = true} : vector<8x64xf32> -> vector<8x64xf32>
    %26 = arith.mulf %22, %25 : vector<8x64xf32>
    %27 = arith.mulf %16, %26 : vector<8x64xf32>
    %28 = arith.truncf %27 : vector<8x64xf32> to vector<8x64xbf16>
    %c0_13 = arith.constant 0 : index
    %c0_14 = arith.constant 0 : index
    %29 = vector.load %arg7[%c0_13, %c0_14] : memref<64x32xbf16, #tpu.memory_space<vmem>>, vector<64x32xbf16>
    %cst_15 = arith.constant dense<0.000000e+00> : vector<8x32xf32>
    %30 = tpu.matmul %28, %29, %cst_15 {dimension_numbers = #tpu.dot_dimension_numbers<[1], [0], [0], [1], [0, 0, 1, 1], [], []>} : vector<8x64xbf16>, vector<64x32xbf16>, vector<8x32xf32> -> vector<8x32xf32>
    %c0_16 = arith.constant 0 : index
    %c0_17 = arith.constant 0 : index
    %31 = vector.load %arg8[%c0_16, %c0_17] : memref<1x32xf32, #tpu.memory_space<vmem>>, vector<1x32xf32>
    %32 = vector.broadcast %31 : vector<1x32xf32> to vector<8x32xf32>
    %33 = arith.addf %30, %32 : vector<8x32xf32>
    %c0_18 = arith.constant 0 : index
    %c0_19 = arith.constant 0 : index
    %34 = vector.load %arg3[%c0_18, %c0_19] : memref<8x34xbf16, #tpu.memory_space<vmem>>, vector<8x34xbf16>
    %c0_20 = arith.constant 0 : index
    %c0_21 = arith.constant 0 : index
    %35 = vector.load %arg9[%c0_20, %c0_21] : memref<34x64xbf16, #tpu.memory_space<vmem>>, vector<34x64xbf16>
    %cst_22 = arith.constant dense<0.000000e+00> : vector<8x64xf32>
    %36 = tpu.matmul %34, %35, %cst_22 {dimension_numbers = #tpu.dot_dimension_numbers<[1], [0], [0], [1], [0, 0, 1, 1], [], []>} : vector<8x34xbf16>, vector<34x64xbf16>, vector<8x64xf32> -> vector<8x64xf32>
    %37 = arith.truncf %33 : vector<8x32xf32> to vector<8x32xbf16>
    %c0_23 = arith.constant 0 : index
    %c0_24 = arith.constant 0 : index
    %38 = vector.load %arg10[%c0_23, %c0_24] : memref<32x64xbf16, #tpu.memory_space<vmem>>, vector<32x64xbf16>
    %cst_25 = arith.constant dense<0.000000e+00> : vector<8x64xf32>
    %39 = tpu.matmul %37, %38, %cst_25 {dimension_numbers = #tpu.dot_dimension_numbers<[1], [0], [0], [1], [0, 0, 1, 1], [], []>} : vector<8x32xbf16>, vector<32x64xbf16>, vector<8x64xf32> -> vector<8x64xf32>
    %40 = arith.addf %36, %39 : vector<8x64xf32>
    %c0_26 = arith.constant 0 : index
    %c0_27 = arith.constant 0 : index
    %41 = vector.load %arg11[%c0_26, %c0_27] : memref<1x64xf32, #tpu.memory_space<vmem>>, vector<1x64xf32>
    %42 = vector.broadcast %41 : vector<1x64xf32> to vector<8x64xf32>
    %43 = arith.addf %40, %42 : vector<8x64xf32>
    %cst_28 = arith.constant 2.000000e+01 : f32
    %44 = vector.broadcast %cst_28 : f32 to vector<8x64xf32>
    %45 = arith.minimumf %43, %44 : vector<8x64xf32>
    %46 = math.exp %45 : vector<8x64xf32>
    %cst_29 = arith.constant 2.000000e+00 : f32
    %47 = vector.broadcast %cst_29 : f32 to vector<8x64xf32>
    %48 = arith.addf %46, %47 : vector<8x64xf32>
    %49 = arith.mulf %46, %48 : vector<8x64xf32>
    %cst_30 = arith.constant 2.000000e+00 : f32
    %50 = vector.broadcast %cst_30 : f32 to vector<8x64xf32>
    %51 = arith.addf %49, %50 : vector<8x64xf32>
    %52 = tpu.reciprocal %51 {approx = true} : vector<8x64xf32> -> vector<8x64xf32>
    %53 = arith.mulf %49, %52 : vector<8x64xf32>
    %54 = arith.mulf %43, %53 : vector<8x64xf32>
    %55 = arith.truncf %54 : vector<8x64xf32> to vector<8x64xbf16>
    %c0_31 = arith.constant 0 : index
    %c0_32 = arith.constant 0 : index
    %56 = vector.load %arg12[%c0_31, %c0_32] : memref<64x64xbf16, #tpu.memory_space<vmem>>, vector<64x64xbf16>
    %cst_33 = arith.constant dense<0.000000e+00> : vector<8x64xf32>
    %57 = tpu.matmul %55, %56, %cst_33 {dimension_numbers = #tpu.dot_dimension_numbers<[1], [0], [0], [1], [0, 0, 1, 1], [], []>} : vector<8x64xbf16>, vector<64x64xbf16>, vector<8x64xf32> -> vector<8x64xf32>
    %c0_34 = arith.constant 0 : index
    %c0_35 = arith.constant 0 : index
    %58 = vector.load %arg13[%c0_34, %c0_35] : memref<1x64xf32, #tpu.memory_space<vmem>>, vector<1x64xf32>
    %59 = vector.broadcast %58 : vector<1x64xf32> to vector<8x64xf32>
    %60 = arith.addf %57, %59 : vector<8x64xf32>
    %cst_36 = arith.constant 2.000000e+01 : f32
    %61 = vector.broadcast %cst_36 : f32 to vector<8x64xf32>
    %62 = arith.minimumf %60, %61 : vector<8x64xf32>
    %63 = math.exp %62 : vector<8x64xf32>
    %cst_37 = arith.constant 2.000000e+00 : f32
    %64 = vector.broadcast %cst_37 : f32 to vector<8x64xf32>
    %65 = arith.addf %63, %64 : vector<8x64xf32>
    %66 = arith.mulf %63, %65 : vector<8x64xf32>
    %cst_38 = arith.constant 2.000000e+00 : f32
    %67 = vector.broadcast %cst_38 : f32 to vector<8x64xf32>
    %68 = arith.addf %66, %67 : vector<8x64xf32>
    %69 = tpu.reciprocal %68 {approx = true} : vector<8x64xf32> -> vector<8x64xf32>
    %70 = arith.mulf %66, %69 : vector<8x64xf32>
    %71 = arith.mulf %60, %70 : vector<8x64xf32>
    %72 = arith.truncf %71 : vector<8x64xf32> to vector<8x64xbf16>
    %c0_39 = arith.constant 0 : index
    %c0_40 = arith.constant 0 : index
    %73 = vector.load %arg14[%c0_39, %c0_40] : memref<64x64xbf16, #tpu.memory_space<vmem>>, vector<64x64xbf16>
    %cst_41 = arith.constant dense<0.000000e+00> : vector<8x64xf32>
    %74 = tpu.matmul %72, %73, %cst_41 {dimension_numbers = #tpu.dot_dimension_numbers<[1], [0], [0], [1], [0, 0, 1, 1], [], []>} : vector<8x64xbf16>, vector<64x64xbf16>, vector<8x64xf32> -> vector<8x64xf32>
    %c0_42 = arith.constant 0 : index
    %c0_43 = arith.constant 0 : index
    %75 = vector.load %arg15[%c0_42, %c0_43] : memref<1x64xf32, #tpu.memory_space<vmem>>, vector<1x64xf32>
    %76 = vector.broadcast %75 : vector<1x64xf32> to vector<8x64xf32>
    %77 = arith.addf %74, %76 : vector<8x64xf32>
    %cst_44 = arith.constant 2.000000e+01 : f32
    %78 = vector.broadcast %cst_44 : f32 to vector<8x64xf32>
    %79 = arith.minimumf %77, %78 : vector<8x64xf32>
    %80 = math.exp %79 : vector<8x64xf32>
    %cst_45 = arith.constant 2.000000e+00 : f32
    %81 = vector.broadcast %cst_45 : f32 to vector<8x64xf32>
    %82 = arith.addf %80, %81 : vector<8x64xf32>
    %83 = arith.mulf %80, %82 : vector<8x64xf32>
    %cst_46 = arith.constant 2.000000e+00 : f32
    %84 = vector.broadcast %cst_46 : f32 to vector<8x64xf32>
    %85 = arith.addf %83, %84 : vector<8x64xf32>
    %86 = tpu.reciprocal %85 {approx = true} : vector<8x64xf32> -> vector<8x64xf32>
    %87 = arith.mulf %83, %86 : vector<8x64xf32>
    %88 = arith.mulf %77, %87 : vector<8x64xf32>
    %89 = arith.truncf %88 : vector<8x64xf32> to vector<8x64xbf16>
    %c0_47 = arith.constant 0 : index
    %c0_48 = arith.constant 0 : index
    %90 = vector.load %arg16[%c0_47, %c0_48] : memref<64x12xbf16, #tpu.memory_space<vmem>>, vector<64x12xbf16>
    %cst_49 = arith.constant dense<0.000000e+00> : vector<8x12xf32>
    %91 = tpu.matmul %89, %90, %cst_49 {dimension_numbers = #tpu.dot_dimension_numbers<[1], [0], [0], [1], [0, 0, 1, 1], [], []>} : vector<8x64xbf16>, vector<64x12xbf16>, vector<8x12xf32> -> vector<8x12xf32>
    %c0_50 = arith.constant 0 : index
    %c0_51 = arith.constant 0 : index
    %92 = vector.load %arg17[%c0_50, %c0_51] : memref<1x12xf32, #tpu.memory_space<vmem>>, vector<1x12xf32>
    %93 = vector.broadcast %92 : vector<1x12xf32> to vector<8x12xf32>
    %94 = arith.addf %91, %93 : vector<8x12xf32>
    %c0_52 = arith.constant 0 : index
    %c0_53 = arith.constant 0 : index
    %95 = vector.load %arg18[%c0_52, %c0_53] : memref<8x12xf32, #tpu.memory_space<vmem>>, vector<8x12xf32>
    tpu.vector_store %arg18[%c0_52, %c0_53], %94 {strides = array<i32>} : memref<8x12xf32, #tpu.memory_space<vmem>>, vector<8x12xf32>,
    return
  }
  func.func @transform_0(%arg0: i32) -> (i32, i32) {
    %c0_i32 = arith.constant 0 : i32
    %c0_i32_0 = arith.constant 0 : i32
    return %arg0, %c0_i32 : i32, i32
  }
  func.func @transform_1(%arg0: i32) -> (i32, i32) {
    %c0_i32 = arith.constant 0 : i32
    %c0_i32_0 = arith.constant 0 : i32
    %c0_i32_1 = arith.constant 0 : i32
    return %c0_i32, %c0_i32_0 : i32, i32
  }
  func.func @transform_2(%arg0: i32) -> (i32, i32) {
    %c0_i32 = arith.constant 0 : i32
    %c0_i32_0 = arith.constant 0 : i32
    return %arg0, %c0_i32 : i32, i32
  }
  func.func @transform_3(%arg0: i32) -> (i32, i32) {
    %c0_i32 = arith.constant 0 : i32
    %c0_i32_0 = arith.constant 0 : i32
    %c0_i32_1 = arith.constant 0 : i32
    return %c0_i32, %c0_i32_0 : i32, i32
  }
  func.func @transform_4(%arg0: i32) -> (i32, i32) {
    %c0_i32 = arith.constant 0 : i32
    %c0_i32_0 = arith.constant 0 : i32
    %c0_i32_1 = arith.constant 0 : i32
    return %c0_i32, %c0_i32_0 : i32, i32
  }
  func.func @transform_5(%arg0: i32) -> (i32, i32) {
    %c0_i32 = arith.constant 0 : i32
    %c0_i32_0 = arith.constant 0 : i32
    %c0_i32_1 = arith.constant 0 : i32
    return %c0_i32, %c0_i32_0 : i32, i32
  }
  func.func @transform_6(%arg0: i32) -> (i32, i32) {
    %c0_i32 = arith.constant 0 : i32
    %c0_i32_0 = arith.constant 0 : i32
    %c0_i32_1 = arith.constant 0 : i32
    return %c0_i32, %c0_i32_0 : i32, i32
  }
  func.func @transform_7(%arg0: i32) -> (i32, i32) {
    %c0_i32 = arith.constant 0 : i32
    %c0_i32_0 = arith.constant 0 : i32
    %c0_i32_1 = arith.constant 0 : i32
    return %c0_i32, %c0_i32_0 : i32, i32
  }
  func.func @transform_8(%arg0: i32) -> (i32, i32) {
    %c0_i32 = arith.constant 0 : i32
    %c0_i32_0 = arith.constant 0 : i32
    %c0_i32_1 = arith.constant 0 : i32
    return %c0_i32, %c0_i32_0 : i32, i32
  }
  func.func @transform_9(%arg0: i32) -> (i32, i32) {
    %c0_i32 = arith.constant 0 : i32
    %c0_i32_0 = arith.constant 0 : i32
    %c0_i32_1 = arith.constant 0 : i32
    return %c0_i32, %c0_i32_0 : i32, i32
  }
  func.func @transform_10(%arg0: i32) -> (i32, i32) {
    %c0_i32 = arith.constant 0 : i32
    %c0_i32_0 = arith.constant 0 : i32
    %c0_i32_1 = arith.constant 0 : i32
    return %c0_i32, %c0_i32_0 : i32, i32
  }
  func.func @transform_11(%arg0: i32) -> (i32, i32) {
    %c0_i32 = arith.constant 0 : i32
    %c0_i32_0 = arith.constant 0 : i32
    %c0_i32_1 = arith.constant 0 : i32
    return %c0_i32, %c0_i32_0 : i32, i32
  }
  func.func @transform_12(%arg0: i32) -> (i32, i32) {
    %c0_i32 = arith.constant 0 : i32
    %c0_i32_0 = arith.constant 0 : i32
    %c0_i32_1 = arith.constant 0 : i32
    return %c0_i32, %c0_i32_0 : i32, i32
  }
  func.func @transform_13(%arg0: i32) -> (i32, i32) {
    %c0_i32 = arith.constant 0 : i32
    %c0_i32_0 = arith.constant 0 : i32
    %c0_i32_1 = arith.constant 0 : i32
    return %c0_i32, %c0_i32_0 : i32, i32
  }
  func.func @transform_14(%arg0: i32) -> (i32, i32) {
    %c0_i32 = arith.constant 0 : i32
    %c0_i32_0 = arith.constant 0 : i32
    %c0_i32_1 = arith.constant 0 : i32
    return %c0_i32, %c0_i32_0 : i32, i32
  }
  func.func @transform_15(%arg0: i32) -> (i32, i32) {
    %c0_i32 = arith.constant 0 : i32
    %c0_i32_0 = arith.constant 0 : i32
    %c0_i32_1 = arith.constant 0 : i32
    return %c0_i32, %c0_i32_0 : i32, i32
  }
  func.func @transform_16(%arg0: i32) -> (i32, i32) {
    %c0_i32 = arith.constant 0 : i32
    %c0_i32_0 = arith.constant 0 : i32
    %c0_i32_1 = arith.constant 0 : i32
    return %c0_i32, %c0_i32_0 : i32, i32
  }
  func.func @transform_17(%arg0: i32) -> (i32, i32) {
    %c0_i32 = arith.constant 0 : i32
    %c0_i32_0 = arith.constant 0 : i32
    return %arg0, %c0_i32 : i32, i32
  }
}

</mosaic_0001>

<llo_original>
// kernel: ma_mlp_forward.1
$region0: #{ma_mlp_forward.1}
  #allocation0 [shape = 'u32[]', space=smem, size = 0x4, offset = 0x4, fixed_abs, tag = 'smem constant byte address 0x4 - core index']
  #allocation1 [shape = 'u32[144,128]{1,0:T(1,128)}', space=vmem, size = 0x12000, scoped, tag = 'internal scratch']
  %s0 = inlined_call_operand.vmem [shape: f32[8,1], index: 0, kind: input, shape index: {}]
  %s1 = inlined_call_operand.vmem [shape: f32[1,8], index: 1, kind: input, shape index: {}]
  %s2 = inlined_call_operand.vmem [shape: bf16[8,34], index: 2, kind: input, shape index: {}]
  %s3 = inlined_call_operand.vmem [shape: bf16[8,64], index: 3, kind: input, shape index: {}]
  %s4 = inlined_call_operand.vmem [shape: bf16[8,64], index: 4, kind: input, shape index: {}]
  %s5 = inlined_call_operand.vmem [shape: f32[1,64], index: 5, kind: input, shape index: {}]
  %s6 = inlined_call_operand.vmem [shape: bf16[64,32], index: 6, kind: input, shape index: {}]
  %s7 = inlined_call_operand.vmem [shape: f32[1,32], index: 7, kind: input, shape index: {}]
  %s8 = inlined_call_operand.vmem [shape: bf16[34,64], index: 8, kind: input, shape index: {}]
  %s9 = inlined_call_operand.vmem [shape: bf16[32,64], index: 9, kind: input, shape index: {}]
  %s10 = inlined_call_operand.vmem [shape: f32[1,64], index: 10, kind: input, shape index: {}]
  %s11 = inlined_call_operand.vmem [shape: bf16[64,64], index: 11, kind: input, shape index: {}]
  %s12 = inlined_call_operand.vmem [shape: f32[1,64], index: 12, kind: input, shape index: {}]
  %s13 = inlined_call_operand.vmem [shape: bf16[64,64], index: 13, kind: input, shape index: {}]
  %s14 = inlined_call_operand.vmem [shape: f32[1,64], index: 14, kind: input, shape index: {}]
  %s15 = inlined_call_operand.vmem [shape: bf16[64,12], index: 15, kind: input, shape index: {}]
  %s16 = inlined_call_operand.vmem [shape: f32[1,12], index: 16, kind: input, shape index: {}]
  %s17 = inlined_call_operand.vmem [shape: f32[8,12], index: 17, kind: output, shape index: {}]
  %s18 = sld [smem:[#allocation0]]
  $region78: #{ma_mlp_forward.1} parent=0
    _
  %s20 = ssub.s32 1, %s18
  %s21 = scalar_select 0, %s20, %s18
  // Predicated region
  $region2: #{ma_mlp_forward.1} parent=0 // pred_check
    _
  $region3: #{ma_mlp_forward.1} parent=0 // pred_check_branch
    %23 = sbr.rel (0) target = $region5
  $region4: #{ma_mlp_forward.1} parent=0 // pred_region
    _
  $region5: #{ma_mlp_forward.1} parent=0 // pred_fallthru
    _
  // Predicated region
  $region6: #{ma_mlp_forward.1} parent=0 // pred_check
    _
  $region7: #{ma_mlp_forward.1} parent=0 // pred_check_branch
    %25 = sbr.rel (0) target = $region9
  $region8: #{ma_mlp_forward.1} parent=0 // pred_region
    _
  $region9: #{ma_mlp_forward.1} parent=0 // pred_fallthru
    _
  // Predicated region
  $region10: #{ma_mlp_forward.1} parent=0 // pred_check
    _
  $region11: #{ma_mlp_forward.1} parent=0 // pred_check_branch
    %27 = sbr.rel (0) target = $region13
  $region12: #{ma_mlp_forward.1} parent=0 // pred_region
    _
  $region13: #{ma_mlp_forward.1} parent=0 // pred_fallthru
    _
  // Predicated region
  $region14: #{ma_mlp_forward.1} parent=0 // pred_check
    _
  $region15: #{ma_mlp_forward.1} parent=0 // pred_check_branch
    %29 = sbr.rel (0) target = $region17
  $region16: #{ma_mlp_forward.1} parent=0 // pred_region
    _
  $region17: #{ma_mlp_forward.1} parent=0 // pred_fallthru
    _
  // Predicated region
  $region18: #{ma_mlp_forward.1} parent=0 // pred_check
    _
  $region19: #{ma_mlp_forward.1} parent=0 // pred_check_branch
    %31 = sbr.rel (0) target = $region21
  $region20: #{ma_mlp_forward.1} parent=0 // pred_region
    _
  $region21: #{ma_mlp_forward.1} parent=0 // pred_fallthru
    _
  // Predicated region
  $region22: #{ma_mlp_forward.1} parent=0 // pred_check
    _
  $region23: #{ma_mlp_forward.1} parent=0 // pred_check_branch
    %33 = sbr.rel (0) target = $region25
  $region24: #{ma_mlp_forward.1} parent=0 // pred_region
    _
  $region25: #{ma_mlp_forward.1} parent=0 // pred_fallthru
    _
  // Predicated region
  $region26: #{ma_mlp_forward.1} parent=0 // pred_check
    _
  $region27: #{ma_mlp_forward.1} parent=0 // pred_check_branch
    %35 = sbr.rel (0) target = $region29
  $region28: #{ma_mlp_forward.1} parent=0 // pred_region
    _
  $region29: #{ma_mlp_forward.1} parent=0 // pred_fallthru
    _
  // Predicated region
  $region30: #{ma_mlp_forward.1} parent=0 // pred_check
    _
  $region31: #{ma_mlp_forward.1} parent=0 // pred_check_branch
    %37 = sbr.rel (0) target = $region33
  $region32: #{ma_mlp_forward.1} parent=0 // pred_region
    _
  $region33: #{ma_mlp_forward.1} parent=0 // pred_fallthru
    _
  // Predicated region
  $region34: #{ma_mlp_forward.1} parent=0 // pred_check
    _
  $region35: #{ma_mlp_forward.1} parent=0 // pred_check_branch
    %39 = sbr.rel (0) target = $region37
  $region36: #{ma_mlp_forward.1} parent=0 // pred_region
    _
  $region37: #{ma_mlp_forward.1} parent=0 // pred_fallthru
    _
  // Predicated region
  $region38: #{ma_mlp_forward.1} parent=0 // pred_check
    _
  $region39: #{ma_mlp_forward.1} parent=0 // pred_check_branch
    %41 = sbr.rel (0) target = $region41
  $region40: #{ma_mlp_forward.1} parent=0 // pred_region
    _
  $region41: #{ma_mlp_forward.1} parent=0 // pred_fallthru
    _
  // Predicated region
  $region42: #{ma_mlp_forward.1} parent=0 // pred_check
    _
  $region43: #{ma_mlp_forward.1} parent=0 // pred_check_branch
    %43 = sbr.rel (0) target = $region45
  $region44: #{ma_mlp_forward.1} parent=0 // pred_region
    _
  $region45: #{ma_mlp_forward.1} parent=0 // pred_fallthru
    _
  // Predicated region
  $region46: #{ma_mlp_forward.1} parent=0 // pred_check
    _
  $region47: #{ma_mlp_forward.1} parent=0 // pred_check_branch
    %45 = sbr.rel (0) target = $region49
  $region48: #{ma_mlp_forward.1} parent=0 // pred_region
    _
  $region49: #{ma_mlp_forward.1} parent=0 // pred_fallthru
    _
  // Predicated region
  $region50: #{ma_mlp_forward.1} parent=0 // pred_check
    _
  $region51: #{ma_mlp_forward.1} parent=0 // pred_check_branch
    %47 = sbr.rel (0) target = $region53
  $region52: #{ma_mlp_forward.1} parent=0 // pred_region
    _
  $region53: #{ma_mlp_forward.1} parent=0 // pred_fallthru
    _
  // Predicated region
  $region54: #{ma_mlp_forward.1} parent=0 // pred_check
    _
  $region55: #{ma_mlp_forward.1} parent=0 // pred_check_branch
    %49 = sbr.rel (0) target = $region57
  $region56: #{ma_mlp_forward.1} parent=0 // pred_region
    _
  $region57: #{ma_mlp_forward.1} parent=0 // pred_fallthru
    _
  // Predicated region
  $region58: #{ma_mlp_forward.1} parent=0 // pred_check
    _
  $region59: #{ma_mlp_forward.1} parent=0 // pred_check_branch
    %51 = sbr.rel (0) target = $region61
  $region60: #{ma_mlp_forward.1} parent=0 // pred_region
    _
  $region61: #{ma_mlp_forward.1} parent=0 // pred_fallthru
    _
  // Predicated region
  $region62: #{ma_mlp_forward.1} parent=0 // pred_check
    _
  $region63: #{ma_mlp_forward.1} parent=0 // pred_check_branch
    %53 = sbr.rel (0) target = $region65
  $region64: #{ma_mlp_forward.1} parent=0 // pred_region
    _
  $region65: #{ma_mlp_forward.1} parent=0 // pred_fallthru
    _
  // Predicated region
  $region66: #{ma_mlp_forward.1} parent=0 // pred_check
    _
  $region67: #{ma_mlp_forward.1} parent=0 // pred_check_branch
    %55 = sbr.rel (0) target = $region69
  $region68: #{ma_mlp_forward.1} parent=0 // pred_region
    _
  $region69: #{ma_mlp_forward.1} parent=0 // pred_fallthru
    _
  %v57 = vld [vmem:[%s0] sm:$0xff]
  %v58 = vld [vmem:[%s1] sm:$0x1]
  %60 = vset.pattern.permute.xlu0 0
  %61 = vperm.xlu0 %60, %v57
  %v62 = vpop.permute.xlu0 %61
  %v65 = vlaneseq
  %v66 = vshrl.u32 %v65, 7
  %v67 = vsub.s32 0, %v66
  %v68 = vrot.slane %v58, %v67
  %v70 = vmul.f32 %v62, %v68
  %v71 = vand.u32 2147483647, %v70
  %vm72 = vcmp.le.f32.partialorder %v71, 0.7853982
  %vm73 = vcmp.lt.s32.totalorder %v70, 0
  %v74 = vand.u32 %v70, 2139095040
  %v75 = vshrl.u32 %v74, 23
  %v76 = vsub.s32 %v75, 127
  %v77 = vand.u32 2147483647, %v70
  %v78 = vand.u32 %v77, 8388607
  %v79 = vor.u32 %v78, 8388608
  %v80 = vsub.s32 0, %v79
  %v81 = vadd.s32 %v76, 1
  %vm82 = vcmp.gt.s32.totalorder %v81, 0
  %v83 = vsel %vm82, %v81, 0
  %v84 = vshrl.u32 %v83, 5
  %v85 = vand.u32 %v83, 31
  %v86 = vsub.s32 32, %v85
  %v87 = vshrl.u32 683565275, %v86
  %v88 = vshll.u32 683565275, %v85
  %v89 = vshrl.u32 2475754826, %v86
  %v90 = vor.u32 %v88, %v89
  %v91 = vshll.u32 2475754826, %v85
  %v92 = vshrl.u32 2131351028, %v86
  %v93 = vor.u32 %v91, %v92
  %v94 = vshll.u32 2131351028, %v85
  %v95 = vshrl.u32 2102212464, %v86
  %v96 = vor.u32 %v94, %v95
  %v97 = vshll.u32 2102212464, %v85
  %v98 = vshrl.u32 920167782, %v86
  %v99 = vor.u32 %v97, %v98
  %v100 = vshll.u32 920167782, %v85
  %v101 = vshrl.u32 1326507024, %v86
  %v102 = vor.u32 %v100, %v101
  %vm103 = vcmp.lt.s32.totalorder %v84, 1
  %vm104 = vcmp.lt.s32.totalorder %v84, 2
  %vm105 = vcmp.lt.s32.totalorder %v84, 3
  %vm106 = vcmp.lt.s32.totalorder %v84, 4
  %v107 = vsel %vm103, %v87, %v90
  %v108 = vsel %vm106, %v96, 2102212464
  %v109 = vsel %vm105, %v93, %v108
  %v110 = vsel %vm104, %v107, %v109
  %v111 = vsel %vm103, %v90, %v93
  %v112 = vsel %vm106, %v99, 920167782
  %v113 = vsel %vm105, %v96, %v112
  %v114 = vsel %vm104, %v111, %v113
  %v115 = vsel %vm103, %v93, %v96
  %v116 = vsel %vm106, %v102, 1326507024
  %v117 = vsel %vm105, %v99, %v116
  %v118 = vsel %vm104, %v115, %v117
  %v119 = vshll.u32 %v79, 8
  %v120 = vmul.u32.u64.compose %v119, %v118
  %v121 = vextract.low.u32 %v120
  %v122 = vextract.high.u32 %v120
  %v123 = vmul.u32.u64.compose %v119, %v114
  %v124 = vextract.low.u32 %v123
  %v125 = vextract.high.u32 %v123
  %v126 = vmul.u32 %v119, %v110
  %v127 = vadd.s32 %v122, %v124
  %vm128 = vc.u32 %v122, %v124
  %v129 = vadd.s32 %v125, 1
  %v130 = vsel %vm128, %v129, %v125
  %v131 = vadd.s32 %v126, %v130
  %v132 = vadd.s32 %v131, 536870912
  %v133 = vshrl.u32 %v132, 30
  %v134 = vshll.u32 %v133, 30
  %v135 = vsub.s32 %v131, %v134
  %vm136 = vcmp.lt.s32.totalorder %v135, 0
  %v137 = vsub.s32 0, %v135
  %v138 = vsel %vm136, %v137, %v135
  %v139 = vclz %v138
  %v140 = vsub.s32 %v139, 2
  %vm141 = vcmp.gt.s32.totalorder 0, %v140
  %v142 = vsel %vm141, 0, %v140
  %v143 = vsub.s32 32, %v142
  %v144 = vshll.u32 %v135, %v142
  %v145 = vshrl.u32 %v127, %v143
  %v146 = vor.u32 %v144, %v145
  %v147 = vsub.s32 4294967266, %v142
  %v148 = vadd.s32 %v147, 127
  %v149 = vshll.u32 %v148, 23
  %v150 = vor.u32 4788187, %v149
  %v151 = vand.u32 2147483647, %v150
  %v153 = vcvt.s32.f32 %v146
  %v154 = vmul.f32 %v153, %v151
  %v155 = vxor.u32 %v154, 2147483648
  %v156 = vsel %vm73, %v155, %v154
  %v157 = vsub.s32 4, %v133
  %v158 = vsel %vm73, %v157, %v133
  %v159 = vsel %vm72, %v70, %v156
  %v160 = vsel %vm72, 0, %v158
  %v161 = vcosq.f32.pop %v159
  %v162 = vsinq.f32.pop %v159
  %vm163 = vweird.f32 %v70
  %v164 = vadd.s32 %v160, 3
  %v165 = vand.u32 %v164, 3
  %vm166 = vcmp.lt.s32.totalorder %v165, 2
  %vm167 = vcmp.eq.s32.totalorder %v165, 0
  %v168 = vxor.u32 %v162, 2147483648
  %v169 = vsel %vm167, %v161, %v168
  %vm170 = vcmp.eq.s32.totalorder %v165, 2
  %v171 = vxor.u32 %v161, 2147483648
  %v172 = vsel %vm170, %v171, %v162
  %v173 = vsel %vm166, %v169, %v172
  %v174 = vsel %vm163, nan, %v173
  %v175 = vand.u32 2147483647, %v70
  %vm176 = vcmp.le.f32.partialorder %v175, 0.7853982
  %vm177 = vcmp.lt.s32.totalorder %v70, 0
  %v178 = vand.u32 %v70, 2139095040
  %v179 = vshrl.u32 %v178, 23
  %v180 = vsub.s32 %v179, 127
  %v181 = vand.u32 2147483647, %v70
  %v182 = vand.u32 %v181, 8388607
  %v183 = vor.u32 %v182, 8388608
  %v184 = vsub.s32 0, %v183
  %v185 = vadd.s32 %v180, 1
  %vm186 = vcmp.gt.s32.totalorder %v185, 0
  %v187 = vsel %vm186, %v185, 0
  %v188 = vshrl.u32 %v187, 5
  %v189 = vand.u32 %v187, 31
  %v190 = vsub.s32 32, %v189
  %v191 = vshrl.u32 683565275, %v190
  %v192 = vshll.u32 683565275, %v189
  %v193 = vshrl.u32 2475754826, %v190
  %v194 = vor.u32 %v192, %v193
  %v195 = vshll.u32 2475754826, %v189
  %v196 = vshrl.u32 2131351028, %v190
  %v197 = vor.u32 %v195, %v196
  %v198 = vshll.u32 2131351028, %v189
  %v199 = vshrl.u32 2102212464, %v190
  %v200 = vor.u32 %v198, %v199
  %v201 = vshll.u32 2102212464, %v189
  %v202 = vshrl.u32 920167782, %v190
  %v203 = vor.u32 %v201, %v202
  %v204 = vshll.u32 920167782, %v189
  %v205 = vshrl.u32 1326507024, %v190
  %v206 = vor.u32 %v204, %v205
  %vm207 = vcmp.lt.s32.totalorder %v188, 1
  %vm208 = vcmp.lt.s32.totalorder %v188, 2
  %vm209 = vcmp.lt.s32.totalorder %v188, 3
  %vm210 = vcmp.lt.s32.totalorder %v188, 4
  %v211 = vsel %vm207, %v191, %v194
  %v212 = vsel %vm210, %v200, 2102212464
  %v213 = vsel %vm209, %v197, %v212
  %v214 = vsel %vm208, %v211, %v213
  %v215 = vsel %vm207, %v194, %v197
  %v216 = vsel %vm210, %v203, 920167782
  %v217 = vsel %vm209, %v200, %v216
  %v218 = vsel %vm208, %v215, %v217
  %v219 = vsel %vm207, %v197, %v200
  %v220 = vsel %vm210, %v206, 1326507024
  %v221 = vsel %vm209, %v203, %v220
  %v222 = vsel %vm208, %v219, %v221
  %v223 = vshll.u32 %v183, 8
  %v224 = vmul.u32.u64.compose %v223, %v222
  %v225 = vextract.low.u32 %v224
  %v226 = vextract.high.u32 %v224
  %v227 = vmul.u32.u64.compose %v223, %v218
  %v228 = vextract.low.u32 %v227
  %v229 = vextract.high.u32 %v227
  %v230 = vmul.u32 %v223, %v214
  %v231 = vadd.s32 %v226, %v228
  %vm232 = vc.u32 %v226, %v228
  %v233 = vadd.s32 %v229, 1
  %v234 = vsel %vm232, %v233, %v229
  %v235 = vadd.s32 %v230, %v234
  %v236 = vadd.s32 %v235, 536870912
  %v237 = vshrl.u32 %v236, 30
  %v238 = vshll.u32 %v237, 30
  %v239 = vsub.s32 %v235, %v238
  %vm240 = vcmp.lt.s32.totalorder %v239, 0
  %v241 = vsub.s32 0, %v239
  %v242 = vsel %vm240, %v241, %v239
  %v243 = vclz %v242
  %v244 = vsub.s32 %v243, 2
  %vm245 = vcmp.gt.s32.totalorder 0, %v244
  %v246 = vsel %vm245, 0, %v244
  %v247 = vsub.s32 32, %v246
  %v248 = vshll.u32 %v239, %v246
  %v249 = vshrl.u32 %v231, %v247
  %v250 = vor.u32 %v248, %v249
  %v251 = vsub.s32 4294967266, %v246
  %v252 = vadd.s32 %v251, 127
  %v253 = vshll.u32 %v252, 23
  %v254 = vor.u32 4788187, %v253
  %v255 = vand.u32 2147483647, %v254
  %v257 = vcvt.s32.f32 %v250
  %v258 = vmul.f32 %v257, %v255
  %v259 = vxor.u32 %v258, 2147483648
  %v260 = vsel %vm177, %v259, %v258
  %v261 = vsub.s32 4, %v237
  %v262 = vsel %vm177, %v261, %v237
  %v263 = vsel %vm176, %v70, %v260
  %v264 = vsel %vm176, 0, %v262
  %v265 = vcosq.f32.pop %v263
  %v266 = vsinq.f32.pop %v263
  %vm267 = vweird.f32 %v70
  %v268 = vand.u32 %v264, 3
  %vm269 = vcmp.lt.s32.totalorder %v268, 2
  %vm270 = vcmp.eq.s32.totalorder %v268, 0
  %v271 = vxor.u32 %v266, 2147483648
  %v272 = vsel %vm270, %v265, %v271
  %vm273 = vcmp.eq.s32.totalorder %v268, 2
  %v274 = vxor.u32 %v265, 2147483648
  %v275 = vsel %vm273, %v274, %v266
  %v276 = vsel %vm269, %v272, %v275
  %v277 = vsel %vm267, nan, %v276
  %v278 = vpack.c.bf16 %v174, %v174
  %v279 = vld [vmem:[%s3] sm:$0xf]
  %v280 = vpack.c.bf16 %v277, %v277
  %v281 = vld [vmem:[%s4] sm:$0xf]
  %vm282 = vcmask 64512
  %v284 = vsel %vm282, %v280, 0
  %vm286 = vcmask 1043456
  %v288 = vsel %vm286, %v281, 0
  %290 = vmatprep.subr.bf16.mxu0 0
  %291 = vmatpush1.bf16.msra.mxu0 0
  %292 = vmatprep.subr.bf16.mxu0 0
  %293 = vmatpush1.bf16.msra.mxu0 0
  %294 = vmatprep.subr.bf16.mxu0 0
  %295 = vmatpush1.bf16.msra.mxu0 0
  %296 = vmatprep.subr.bf16.mxu0 0
  %297 = vmatpush1.bf16.msra.mxu0 0
  %298 = vmatprep.subr.bf16.mxu0 0
  %299 = vmatpush1.bf16.msra.mxu0 0
  %300 = vmatprep.subr.bf16.mxu0 0
  %301 = vmatpush1.bf16.msra.mxu0 0
  %302 = vmatprep.subr.bf16.mxu0 0
  %303 = vmatpush1.bf16.msra.mxu0 0
  %304 = vmatprep.subr.bf16.mxu0 0
  %305 = vmatpush1.bf16.msra.mxu0 %v288
  %306 = vmatprep.subr.bf16.mxu0 0
  %307 = vmatpush2.bf16.msra.mxu0 0
  %308 = vmatprep.subr.bf16.mxu0 0
  %309 = vmatpush2.bf16.msra.mxu0 0
  %310 = vmatprep.subr.bf16.mxu0 0
  %311 = vmatpush2.bf16.msra.mxu0 0
  %312 = vmatprep.subr.bf16.mxu0 0
  %313 = vmatpush2.bf16.msra.mxu0 0
  %314 = vmatprep.subr.bf16.mxu0 0
  %315 = vmatpush2.bf16.msra.mxu0 0
  %316 = vmatprep.subr.bf16.mxu0 0
  %317 = vmatpush2.bf16.msra.mxu0 0
  %318 = vmatprep.subr.bf16.mxu0 0
  %319 = vmatpush2.bf16.msra.mxu0 0
  %320 = vmatprep.subr.bf16.mxu0 0
  %321 = vmatpush2.bf16.msra.mxu0 0
  %322 = vmatprep.mubr.bf16.mxu0 0
  %323 = vmatmul.mubr.bf16.gmra.mxu0 %v284
  %v324 = vpop.f32.mrf.mxu0
  %v325 = vadd.f32 0.0, %v324
  %v326 = vpop.f32.mrf.mxu0
  %v327 = vpop.f32.mrf.mxu0
  %v328 = vpop.f32.mrf.mxu0
  %329 = vdwg.mxu0
  %v331 = vsel %vm282, %v278, 0
  %v334 = vsel %vm286, %v279, 0
  %336 = vmatprep.subr.bf16.mxu0 0
  %337 = vmatpush1.bf16.msra.mxu0 0
  %338 = vmatprep.subr.bf16.mxu0 0
  %339 = vmatpush1.bf16.msra.mxu0 0
  %340 = vmatprep.subr.bf16.mxu0 0
  %341 = vmatpush1.bf16.msra.mxu0 0
  %342 = vmatprep.subr.bf16.mxu0 0
  %343 = vmatpush1.bf16.msra.mxu0 0
  %344 = vmatprep.subr.bf16.mxu0 0
  %345 = vmatpush1.bf16.msra.mxu0 0
  %346 = vmatprep.subr.bf16.mxu0 0
  %347 = vmatpush1.bf16.msra.mxu0 0
  %348 = vmatprep.subr.bf16.mxu0 0
  %349 = vmatpush1.bf16.msra.mxu0 0
  %350 = vmatprep.subr.bf16.mxu0 0
  %351 = vmatpush1.bf16.msra.mxu0 %v334
  %352 = vmatprep.subr.bf16.mxu0 0
  %353 = vmatpush2.bf16.msra.mxu0 0
  %354 = vmatprep.subr.bf16.mxu0 0
  %355 = vmatpush2.bf16.msra.mxu0 0
  %356 = vmatprep.subr.bf16.mxu0 0
  %357 = vmatpush2.bf16.msra.mxu0 0
  %358 = vmatprep.subr.bf16.mxu0 0
  %359 = vmatpush2.bf16.msra.mxu0 0
  %360 = vmatprep.subr.bf16.mxu0 0
  %361 = vmatpush2.bf16.msra.mxu0 0
  %362 = vmatprep.subr.bf16.mxu0 0
  %363 = vmatpush2.bf16.msra.mxu0 0
  %364 = vmatprep.subr.bf16.mxu0 0
  %365 = vmatpush2.bf16.msra.mxu0 0
  %366 = vmatprep.subr.bf16.mxu0 0
  %367 = vmatpush2.bf16.msra.mxu0 0
  %368 = vmatprep.mubr.bf16.mxu0 0
  %369 = vmatmul.mubr.bf16.gmra.mxu0 %v331
  %v370 = vpop.f32.mrf.mxu0
  %v371 = vadd.f32 %v325, %v370
  %v372 = vpop.f32.mrf.mxu0
  %v373 = vpop.f32.mrf.mxu0
  %v374 = vpop.f32.mrf.mxu0
  %375 = vdwg.mxu0
  %v376 = vld [vmem:[%s5] sm:$0x1]
  %v378 = vlaneseq
  %v379 = vshrl.u32 %v378, 7
  %v380 = vsub.s32 0, %v379
  %v381 = vrot.slane %v376, %v380
  %v383 = vadd.f32 %v371, %v381
  %v384 = vmin.f32 %v383, 20.0
  %v385 = vmul.f32 %v384, 1.442695
  %v386 = vpow.pop %v385
  %v387 = vadd.f32 %v386, 2.0
  %v388 = vmul.f32 %v386, %v387
  %v389 = vadd.f32 %v388, 2.0
  %v390 = vrcp.pop %v389
  %v391 = vmul.f32 %v388, %v390
  %v392 = vmul.f32 %v383, %v391
  %v393 = vpack.c.bf16 %v392, %v392
  %v394 = vld [vmem:[%s6] sm:$0xf]
  %v395 = vld [vmem:[%s6 + $0x4] sm:$0xf]
  %v396 = vld [vmem:[%s6 + $0x8] sm:$0xf]
  %v397 = vld [vmem:[%s6 + $0xc] sm:$0xf]
  %v398 = vld [vmem:[%s6 + $0x10] sm:$0xf]
  %v399 = vld [vmem:[%s6 + $0x14] sm:$0xf]
  %v400 = vld [vmem:[%s6 + $0x18] sm:$0xf]
  %v401 = vld [vmem:[%s6 + $0x1c] sm:$0xf]
  %v402 = vld [vmem:[%s7] sm:$0x1]
  %v404 = vlaneseq
  %v405 = vshrl.u32 %v404, 7
  %v406 = vsub.s32 0, %v405
  %v407 = vrot.slane %v402, %v406
  %v417 = vunpack.c.l.b16 %v394
  %v418 = vunpack.c.l.b16 %v395
  %v419 = vunpack.c.l.b16 %v396
  %v420 = vunpack.c.l.b16 %v397
  %v421 = vunpack.c.l.b16 %v398
  %v422 = vunpack.c.l.b16 %v399
  %v423 = vunpack.c.l.b16 %v400
  %v424 = vunpack.c.l.b16 %v401
  %v425 = vpack.c.b16 %v418, %v417
  %v426 = vpack.c.b16 %v420, %v419
  %v427 = vpack.c.b16 %v422, %v421
  %v428 = vpack.c.b16 %v424, %v423
  %vm433 = vcmask 523264
  %v435 = vsel %vm433, %v393, 0
  %437 = vmatprep.subr.bf16.mxu0 0
  %438 = vmatpush1.bf16.msra.mxu0 0
  %439 = vmatprep.subr.bf16.mxu0 0
  %440 = vmatpush1.bf16.msra.mxu0 0
  %441 = vmatprep.subr.bf16.mxu0 0
  %442 = vmatpush1.bf16.msra.mxu0 0
  %443 = vmatprep.subr.bf16.mxu0 0
  %444 = vmatpush1.bf16.msra.mxu0 0
  %445 = vmatprep.subr.bf16.mxu0 0
  %446 = vmatpush1.bf16.msra.mxu0 %v428
  %447 = vmatprep.subr.bf16.mxu0 0
  %448 = vmatpush1.bf16.msra.mxu0 %v427
  %449 = vmatprep.subr.bf16.mxu0 0
  %450 = vmatpush1.bf16.msra.mxu0 %v426
  %451 = vmatprep.subr.bf16.mxu0 0
  %452 = vmatpush1.bf16.msra.mxu0 %v425
  %453 = vmatprep.subr.bf16.mxu0 0
  %454 = vmatpush2.bf16.msra.mxu0 0
  %455 = vmatprep.subr.bf16.mxu0 0
  %456 = vmatpush2.bf16.msra.mxu0 0
  %457 = vmatprep.subr.bf16.mxu0 0
  %458 = vmatpush2.bf16.msra.mxu0 0
  %459 = vmatprep.subr.bf16.mxu0 0
  %460 = vmatpush2.bf16.msra.mxu0 0
  %461 = vmatprep.subr.bf16.mxu0 0
  %462 = vmatpush2.bf16.msra.mxu0 0
  %463 = vmatprep.subr.bf16.mxu0 0
  %464 = vmatpush2.bf16.msra.mxu0 0
  %465 = vmatprep.subr.bf16.mxu0 0
  %466 = vmatpush2.bf16.msra.mxu0 0
  %467 = vmatprep.subr.bf16.mxu0 0
  %468 = vmatpush2.bf16.msra.mxu0 0
  %469 = vmatprep.mubr.bf16.mxu0 0
  %470 = vmatmul.mubr.bf16.gmra.mxu0 %v435
  %v471 = vpop.f32.mrf.mxu0
  %v472 = vadd.f32 %v407, %v471
  %v473 = vpop.f32.mrf.mxu0
  %v474 = vpop.f32.mrf.mxu0
  %v475 = vpop.f32.mrf.mxu0
  %476 = vdwg.mxu0
  %v477 = vld [vmem:[%s2] sm:$0xf]
  %v478 = vld [vmem:[%s8] sm:$0xf]
  %v479 = vld [vmem:[%s8 + $0x4] sm:$0xf]
  %v480 = vld [vmem:[%s8 + $0x8] sm:$0xf]
  %v481 = vld [vmem:[%s8 + $0xc] sm:$0xf]
  %v482 = vld [vmem:[%s8 + $0x10] sm:$0x1]
  %v483 = vpack.c.bf16 %v472, %v472
  %v484 = vld [vmem:[%s9] sm:$0xf]
  %v485 = vld [vmem:[%s9 + $0x4] sm:$0xf]
  %v486 = vld [vmem:[%s9 + $0x8] sm:$0xf]
  %v487 = vld [vmem:[%s9 + $0xc] sm:$0xf]
  %v492 = vunpack.c.l.b16 %v484
  %v493 = vunpack.c.l.b16 %v485
  %v494 = vunpack.c.l.b16 %v486
  %v495 = vunpack.c.l.b16 %v487
  %v496 = vpack.c.b16 %v493, %v492
  %v497 = vpack.c.b16 %v495, %v494
  %vm500 = vcmask 261120
  %v502 = vsel %vm500, %v483, 0
  %504 = vmatprep.subr.bf16.mxu0 0
  %505 = vmatpush1.bf16.msra.mxu0 0
  %506 = vmatprep.subr.bf16.mxu0 0
  %507 = vmatpush1.bf16.msra.mxu0 0
  %508 = vmatprep.subr.bf16.mxu0 0
  %509 = vmatpush1.bf16.msra.mxu0 0
  %510 = vmatprep.subr.bf16.mxu0 0
  %511 = vmatpush1.bf16.msra.mxu0 0
  %512 = vmatprep.subr.bf16.mxu0 0
  %513 = vmatpush1.bf16.msra.mxu0 0
  %514 = vmatprep.subr.bf16.mxu0 0
  %515 = vmatpush1.bf16.msra.mxu0 0
  %516 = vmatprep.subr.bf16.mxu0 0
  %517 = vmatpush1.bf16.msra.mxu0 %v497
  %518 = vmatprep.subr.bf16.mxu0 0
  %519 = vmatpush1.bf16.msra.mxu0 %v496
  %520 = vmatprep.subr.bf16.mxu0 0
  %521 = vmatpush2.bf16.msra.mxu0 0
  %522 = vmatprep.subr.bf16.mxu0 0
  %523 = vmatpush2.bf16.msra.mxu0 0
  %524 = vmatprep.subr.bf16.mxu0 0
  %525 = vmatpush2.bf16.msra.mxu0 0
  %526 = vmatprep.subr.bf16.mxu0 0
  %527 = vmatpush2.bf16.msra.mxu0 0
  %528 = vmatprep.subr.bf16.mxu0 0
  %529 = vmatpush2.bf16.msra.mxu0 0
  %530 = vmatprep.subr.bf16.mxu0 0
  %531 = vmatpush2.bf16.msra.mxu0 0
  %532 = vmatprep.subr.bf16.mxu0 0
  %533 = vmatpush2.bf16.msra.mxu0 0
  %534 = vmatprep.subr.bf16.mxu0 0
  %535 = vmatpush2.bf16.msra.mxu0 0
  %536 = vmatprep.mubr.bf16.mxu0 0
  %537 = vmatmul.mubr.bf16.gmra.mxu0 %v502
  %v538 = vpop.f32.mrf.mxu0
  %v539 = vadd.f32 0.0, %v538
  %v540 = vpop.f32.mrf.mxu0
  %v541 = vpop.f32.mrf.mxu0
  %v542 = vpop.f32.mrf.mxu0
  %543 = vdwg.mxu0
  %v549 = vunpack.c.l.b16 %v478
  %v550 = vunpack.c.l.b16 %v479
  %v551 = vunpack.c.l.b16 %v480
  %v552 = vunpack.c.l.b16 %v481
  %v553 = vunpack.c.l.b16 %v482
  %v554 = vpack.c.b16 %v550, %v549
  %v555 = vpack.c.b16 %v552, %v551
  %v556 = vpack.c.b16 %v553, %v553
  %vm559 = vcmask 277504
  %v561 = vsel %vm559, %v477, 0
  %vm563 = vcmask 1040384
  %v565 = vsel %vm563, %v556, 0
  %567 = vmatprep.subr.bf16.mxu0 0
  %568 = vmatpush1.bf16.msra.mxu0 0
  %569 = vmatprep.subr.bf16.mxu0 0
  %570 = vmatpush1.bf16.msra.mxu0 0
  %571 = vmatprep.subr.bf16.mxu0 0
  %572 = vmatpush1.bf16.msra.mxu0 0
  %573 = vmatprep.subr.bf16.mxu0 0
  %574 = vmatpush1.bf16.msra.mxu0 0
  %575 = vmatprep.subr.bf16.mxu0 0
  %576 = vmatpush1.bf16.msra.mxu0 0
  %577 = vmatprep.subr.bf16.mxu0 0
  %578 = vmatpush1.bf16.msra.mxu0 %v565
  %579 = vmatprep.subr.bf16.mxu0 0
  %580 = vmatpush1.bf16.msra.mxu0 %v555
  %581 = vmatprep.subr.bf16.mxu0 0
  %582 = vmatpush1.bf16.msra.mxu0 %v554
  %583 = vmatprep.subr.bf16.mxu0 0
  %584 = vmatpush2.bf16.msra.mxu0 0
  %585 = vmatprep.subr.bf16.mxu0 0
  %586 = vmatpush2.bf16.msra.mxu0 0
  %587 = vmatprep.subr.bf16.mxu0 0
  %588 = vmatpush2.bf16.msra.mxu0 0
  %589 = vmatprep.subr.bf16.mxu0 0
  %590 = vmatpush2.bf16.msra.mxu0 0
  %591 = vmatprep.subr.bf16.mxu0 0
  %592 = vmatpush2.bf16.msra.mxu0 0
  %593 = vmatprep.subr.bf16.mxu0 0
  %594 = vmatpush2.bf16.msra.mxu0 0
  %595 = vmatprep.subr.bf16.mxu0 0
  %596 = vmatpush2.bf16.msra.mxu0 0
  %597 = vmatprep.subr.bf16.mxu0 0
  %598 = vmatpush2.bf16.msra.mxu0 0
  %599 = vmatprep.mubr.bf16.mxu0 0
  %600 = vmatmul.mubr.bf16.gmra.mxu0 %v561
  %v601 = vpop.f32.mrf.mxu0
  %v602 = vadd.f32 %v539, %v601
  %v603 = vpop.f32.mrf.mxu0
  %v604 = vpop.f32.mrf.mxu0
  %v605 = vpop.f32.mrf.mxu0
  %606 = vdwg.mxu0
  %v607 = vld [vmem:[%s10] sm:$0x1]
  %v609 = vlaneseq
  %v610 = vshrl.u32 %v609, 7
  %v611 = vsub.s32 0, %v610
  %v612 = vrot.slane %v607, %v611
  %v614 = vadd.f32 %v602, %v612
  %v615 = vmin.f32 %v614, 20.0
  %v616 = vmul.f32 %v615, 1.442695
  %v617 = vpow.pop %v616
  %v618 = vadd.f32 %v617, 2.0
  %v619 = vmul.f32 %v617, %v618
  %v620 = vadd.f32 %v619, 2.0
  %v621 = vrcp.pop %v620
  %v622 = vmul.f32 %v619, %v621
  %v623 = vmul.f32 %v614, %v622
  %v624 = vpack.c.bf16 %v623, %v623
  %v625 = vld [vmem:[%s11] sm:$0xf]
  %v626 = vld [vmem:[%s11 + $0x4] sm:$0xf]
  %v627 = vld [vmem:[%s11 + $0x8] sm:$0xf]
  %v628 = vld [vmem:[%s11 + $0xc] sm:$0xf]
  %v629 = vld [vmem:[%s11 + $0x10] sm:$0xf]
  %v630 = vld [vmem:[%s11 + $0x14] sm:$0xf]
  %v631 = vld [vmem:[%s11 + $0x18] sm:$0xf]
  %v632 = vld [vmem:[%s11 + $0x1c] sm:$0xf]
  %v633 = vld [vmem:[%s12] sm:$0x1]
  %v635 = vlaneseq
  %v636 = vshrl.u32 %v635, 7
  %v637 = vsub.s32 0, %v636
  %v638 = vrot.slane %v633, %v637
  %v648 = vunpack.c.l.b16 %v625
  %v649 = vunpack.c.l.b16 %v626
  %v650 = vunpack.c.l.b16 %v627
  %v651 = vunpack.c.l.b16 %v628
  %v652 = vunpack.c.l.b16 %v629
  %v653 = vunpack.c.l.b16 %v630
  %v654 = vunpack.c.l.b16 %v631
  %v655 = vunpack.c.l.b16 %v632
  %v656 = vpack.c.b16 %v649, %v648
  %v657 = vpack.c.b16 %v651, %v650
  %v658 = vpack.c.b16 %v653, %v652
  %v659 = vpack.c.b16 %v655, %v654
  %v665 = vsel %vm433, %v624, 0
  %667 = vmatprep.subr.bf16.mxu0 0
  %668 = vmatpush1.bf16.msra.mxu0 0
  %669 = vmatprep.subr.bf16.mxu0 0
  %670 = vmatpush1.bf16.msra.mxu0 0
  %671 = vmatprep.subr.bf16.mxu0 0
  %672 = vmatpush1.bf16.msra.mxu0 0
  %673 = vmatprep.subr.bf16.mxu0 0
  %674 = vmatpush1.bf16.msra.mxu0 0
  %675 = vmatprep.subr.bf16.mxu0 0
  %676 = vmatpush1.bf16.msra.mxu0 %v659
  %677 = vmatprep.subr.bf16.mxu0 0
  %678 = vmatpush1.bf16.msra.mxu0 %v658
  %679 = vmatprep.subr.bf16.mxu0 0
  %680 = vmatpush1.bf16.msra.mxu0 %v657
  %681 = vmatprep.subr.bf16.mxu0 0
  %682 = vmatpush1.bf16.msra.mxu0 %v656
  %683 = vmatprep.subr.bf16.mxu0 0
  %684 = vmatpush2.bf16.msra.mxu0 0
  %685 = vmatprep.subr.bf16.mxu0 0
  %686 = vmatpush2.bf16.msra.mxu0 0
  %687 = vmatprep.subr.bf16.mxu0 0
  %688 = vmatpush2.bf16.msra.mxu0 0
  %689 = vmatprep.subr.bf16.mxu0 0
  %690 = vmatpush2.bf16.msra.mxu0 0
  %691 = vmatprep.subr.bf16.mxu0 0
  %692 = vmatpush2.bf16.msra.mxu0 0
  %693 = vmatprep.subr.bf16.mxu0 0
  %694 = vmatpush2.bf16.msra.mxu0 0
  %695 = vmatprep.subr.bf16.mxu0 0
  %696 = vmatpush2.bf16.msra.mxu0 0
  %697 = vmatprep.subr.bf16.mxu0 0
  %698 = vmatpush2.bf16.msra.mxu0 0
  %699 = vmatprep.mubr.bf16.mxu0 0
  %700 = vmatmul.mubr.bf16.gmra.mxu0 %v665
  %v701 = vpop.f32.mrf.mxu0
  %v702 = vadd.f32 %v638, %v701
  %v703 = vpop.f32.mrf.mxu0
  %v704 = vpop.f32.mrf.mxu0
  %v705 = vpop.f32.mrf.mxu0
  %706 = vdwg.mxu0
  %v707 = vmin.f32 %v702, 20.0
  %v708 = vmul.f32 %v707, 1.442695
  %v709 = vpow.pop %v708
  %v710 = vadd.f32 %v709, 2.0
  %v711 = vmul.f32 %v709, %v710
  %v712 = vadd.f32 %v711, 2.0
  %v713 = vrcp.pop %v712
  %v714 = vmul.f32 %v711, %v713
  %v715 = vmul.f32 %v702, %v714
  %v716 = vpack.c.bf16 %v715, %v715
  %v717 = vld [vmem:[%s13] sm:$0xf]
  %v718 = vld [vmem:[%s13 + $0x4] sm:$0xf]
  %v719 = vld [vmem:[%s13 + $0x8] sm:$0xf]
  %v720 = vld [vmem:[%s13 + $0xc] sm:$0xf]
  %v721 = vld [vmem:[%s13 + $0x10] sm:$0xf]
  %v722 = vld [vmem:[%s13 + $0x14] sm:$0xf]
  %v723 = vld [vmem:[%s13 + $0x18] sm:$0xf]
  %v724 = vld [vmem:[%s13 + $0x1c] sm:$0xf]
  %v725 = vld [vmem:[%s14] sm:$0x1]
  %v727 = vlaneseq
  %v728 = vshrl.u32 %v727, 7
  %v729 = vsub.s32 0, %v728
  %v730 = vrot.slane %v725, %v729
  %v740 = vunpack.c.l.b16 %v717
  %v741 = vunpack.c.l.b16 %v718
  %v742 = vunpack.c.l.b16 %v719
  %v743 = vunpack.c.l.b16 %v720
  %v744 = vunpack.c.l.b16 %v721
  %v745 = vunpack.c.l.b16 %v722
  %v746 = vunpack.c.l.b16 %v723
  %v747 = vunpack.c.l.b16 %v724
  %v748 = vpack.c.b16 %v741, %v740
  %v749 = vpack.c.b16 %v743, %v742
  %v750 = vpack.c.b16 %v745, %v744
  %v751 = vpack.c.b16 %v747, %v746
  %v757 = vsel %vm433, %v716, 0
  %759 = vmatprep.subr.bf16.mxu0 0
  %760 = vmatpush1.bf16.msra.mxu0 0
  %761 = vmatprep.subr.bf16.mxu0 0
  %762 = vmatpush1.bf16.msra.mxu0 0
  %763 = vmatprep.subr.bf16.mxu0 0
  %764 = vmatpush1.bf16.msra.mxu0 0
  %765 = vmatprep.subr.bf16.mxu0 0
  %766 = vmatpush1.bf16.msra.mxu0 0
  %767 = vmatprep.subr.bf16.mxu0 0
  %768 = vmatpush1.bf16.msra.mxu0 %v751
  %769 = vmatprep.subr.bf16.mxu0 0
  %770 = vmatpush1.bf16.msra.mxu0 %v750
  %771 = vmatprep.subr.bf16.mxu0 0
  %772 = vmatpush1.bf16.msra.mxu0 %v749
  %773 = vmatprep.subr.bf16.mxu0 0
  %774 = vmatpush1.bf16.msra.mxu0 %v748
  %775 = vmatprep.subr.bf16.mxu0 0
  %776 = vmatpush2.bf16.msra.mxu0 0
  %777 = vmatprep.subr.bf16.mxu0 0
  %778 = vmatpush2.bf16.msra.mxu0 0
  %779 = vmatprep.subr.bf16.mxu0 0
  %780 = vmatpush2.bf16.msra.mxu0 0
  %781 = vmatprep.subr.bf16.mxu0 0
  %782 = vmatpush2.bf16.msra.mxu0 0
  %783 = vmatprep.subr.bf16.mxu0 0
  %784 = vmatpush2.bf16.msra.mxu0 0
  %785 = vmatprep.subr.bf16.mxu0 0
  %786 = vmatpush2.bf16.msra.mxu0 0
  %787 = vmatprep.subr.bf16.mxu0 0
  %788 = vmatpush2.bf16.msra.mxu0 0
  %789 = vmatprep.subr.bf16.mxu0 0
  %790 = vmatpush2.bf16.msra.mxu0 0
  %791 = vmatprep.mubr.bf16.mxu0 0
  %792 = vmatmul.mubr.bf16.gmra.mxu0 %v757
  %v793 = vpop.f32.mrf.mxu0
  %v794 = vadd.f32 %v730, %v793
  %v795 = vpop.f32.mrf.mxu0
  %v796 = vpop.f32.mrf.mxu0
  %v797 = vpop.f32.mrf.mxu0
  %798 = vdwg.mxu0
  %v799 = vmin.f32 %v794, 20.0
  %v800 = vmul.f32 %v799, 1.442695
  %v801 = vpow.pop %v800
  %v802 = vadd.f32 %v801, 2.0
  %v803 = vmul.f32 %v801, %v802
  %v804 = vadd.f32 %v803, 2.0
  %v805 = vrcp.pop %v804
  %v806 = vmul.f32 %v803, %v805
  %v807 = vmul.f32 %v794, %v806
  %v808 = vpack.c.bf16 %v807, %v807
  %v809 = vld [vmem:[%s15] sm:$0xf]
  %v810 = vld [vmem:[%s15 + $0x4] sm:$0xf]
  %v811 = vld [vmem:[%s15 + $0x8] sm:$0xf]
  %v812 = vld [vmem:[%s15 + $0xc] sm:$0xf]
  %v813 = vld [vmem:[%s15 + $0x10] sm:$0xf]
  %v814 = vld [vmem:[%s15 + $0x14] sm:$0xf]
  %v815 = vld [vmem:[%s15 + $0x18] sm:$0xf]
  %v816 = vld [vmem:[%s15 + $0x1c] sm:$0xf]
  %v817 = vld [vmem:[%s16] sm:$0x1]
  %v819 = vlaneseq
  %v820 = vshrl.u32 %v819, 7
  %v821 = vsub.s32 0, %v820
  %v822 = vrot.slane %v817, %v821
  %v832 = vunpack.c.l.b16 %v809
  %v833 = vunpack.c.l.b16 %v810
  %v834 = vunpack.c.l.b16 %v811
  %v835 = vunpack.c.l.b16 %v812
  %v836 = vunpack.c.l.b16 %v813
  %v837 = vunpack.c.l.b16 %v814
  %v838 = vunpack.c.l.b16 %v815
  %v839 = vunpack.c.l.b16 %v816
  %v840 = vpack.c.b16 %v833, %v832
  %v841 = vpack.c.b16 %v835, %v834
  %v842 = vpack.c.b16 %v837, %v836
  %v843 = vpack.c.b16 %v839, %v838
  %v849 = vsel %vm433, %v808, 0
  %851 = vmatprep.subr.bf16.mxu0 0
  %852 = vmatpush1.bf16.msra.mxu0 0
  %853 = vmatprep.subr.bf16.mxu0 0
  %854 = vmatpush1.bf16.msra.mxu0 0
  %855 = vmatprep.subr.bf16.mxu0 0
  %856 = vmatpush1.bf16.msra.mxu0 0
  %857 = vmatprep.subr.bf16.mxu0 0
  %858 = vmatpush1.bf16.msra.mxu0 0
  %859 = vmatprep.subr.bf16.mxu0 0
  %860 = vmatpush1.bf16.msra.mxu0 %v843
  %861 = vmatprep.subr.bf16.mxu0 0
  %862 = vmatpush1.bf16.msra.mxu0 %v842
  %863 = vmatprep.subr.bf16.mxu0 0
  %864 = vmatpush1.bf16.msra.mxu0 %v841
  %865 = vmatprep.subr.bf16.mxu0 0
  %866 = vmatpush1.bf16.msra.mxu0 %v840
  %867 = vmatprep.subr.bf16.mxu0 0
  %868 = vmatpush2.bf16.msra.mxu0 0
  %869 = vmatprep.subr.bf16.mxu0 0
  %870 = vmatpush2.bf16.msra.mxu0 0
  %871 = vmatprep.subr.bf16.mxu0 0
  %872 = vmatpush2.bf16.msra.mxu0 0
  %873 = vmatprep.subr.bf16.mxu0 0
  %874 = vmatpush2.bf16.msra.mxu0 0
  %875 = vmatprep.subr.bf16.mxu0 0
  %876 = vmatpush2.bf16.msra.mxu0 0
  %877 = vmatprep.subr.bf16.mxu0 0
  %878 = vmatpush2.bf16.msra.mxu0 0
  %879 = vmatprep.subr.bf16.mxu0 0
  %880 = vmatpush2.bf16.msra.mxu0 0
  %881 = vmatprep.subr.bf16.mxu0 0
  %882 = vmatpush2.bf16.msra.mxu0 0
  %883 = vmatprep.mubr.bf16.mxu0 0
  %884 = vmatmul.mubr.bf16.gmra.mxu0 %v849
  %v885 = vpop.f32.mrf.mxu0
  %v886 = vadd.f32 %v822, %v885
  %v887 = vpop.f32.mrf.mxu0
  %v888 = vpop.f32.mrf.mxu0
  %v889 = vpop.f32.mrf.mxu0
  %890 = vdwg.mxu0
  %vm891 = vcmask 97280
  %892 = vst.msk [vmem:[%s17] sm:$0xff] %vm891, %v886
  // Predicated region
  $region70: #{ma_mlp_forward.1} parent=0 // pred_check
    _
  $region71: #{ma_mlp_forward.1} parent=0 // pred_check_branch
    %894 = sbr.rel (0) target = $region73
  $region72: #{ma_mlp_forward.1} parent=0 // pred_region
    _
  $region73: #{ma_mlp_forward.1} parent=0 // pred_fallthru
    _
  // Predicated region
  $region74: #{ma_mlp_forward.1} parent=0 // pred_check
    _
  $region75: #{ma_mlp_forward.1} parent=0 // pred_check_branch
    %896 = sbr.rel (0) target = $region77
  $region76: #{ma_mlp_forward.1} parent=0 // pred_region
    _
  $region77: #{ma_mlp_forward.1} parent=0 // pred_fallthru
    _

</llo_original>
